<compile_context>
chip_gen: v5e
topology: v5e:2x2
jax: 0.10.0
libtpu: 0.0.40
codegen_flags: <defaults>
</compile_context>

<pallas_src>
import jax
import jax.numpy as jnp
from jax.experimental import pallas as pl
from jax.experimental.pallas import tpu as pltpu


LANE = 128
SUBLANE = 8


def _round_up(x, m):
    return ((x + m - 1) // m) * m


def mncm_kernel(fa_ref, w1_ref, w2b_ref, b2_ref, out_ref):
    # Hidden layer: single MXU pass.  K = n_features + n_actions + 1
    # (fc_pre rotation and b1 already folded into w1 on the host).
    h = jnp.dot(fa_ref[...], w1_ref[...], preferred_element_type=jnp.float32)
    h = jnp.maximum(h, 0.0)                       # ReLU in f32 (VPU)

    # Block-diagonal per-model readout as a lane-dense (MH_pad, 128) matmul.
    # NOTE: the zero-padded block-diagonal is fine at small n_models; for very
    # large ensembles switch to a per-model reduction to avoid O(M^2*H) VMEM.
    out = jnp.dot(h.astype(w2b_ref.dtype), w2b_ref[...],
                  preferred_element_type=jnp.float32) + b2_ref[...]
    out_ref[...] = out                            # unmasked full-lane store


def many_network_combined_forward(f_t, a_t, kp, *, block_b=512):
    """Forward pass.  kp comes from prepare_kernel_params()."""
    B = f_t.shape[0]
    matmul_dtype = kp["w1"].dtype

    # Build [f, a, 1] once in XLA (outside the kernel); the trailing ones
    # column carries the folded first-layer bias.
    ones = jnp.ones((B, 1), matmul_dtype)
    fa = jnp.concatenate(
        [f_t.astype(matmul_dtype), a_t.astype(matmul_dtype), ones], axis=1)

    # Batch tiling: TB >= 512 when the batch allows, always a multiple of 8.
    tb = min(block_b, _round_up(max(B, SUBLANE), SUBLANE))
    b_pad = _round_up(B, tb)
    if b_pad != B:
        fa = jnp.pad(fa, ((0, b_pad - B), (0, 0)))

    k_aug = fa.shape[1]
    mh = kp["w1"].shape[1]
    mp = kp["w2b"].shape[1]

    out = pl.pallas_call(
        mncm_kernel,
        out_shape=jax.ShapeDtypeStruct((b_pad, mp), jnp.float32),
        grid=(b_pad // tb,),
        in_specs=[
            pl.BlockSpec((tb, k_aug), lambda i: (i, 0)),   # [f, a, 1] tile
            pl.BlockSpec((k_aug, mh), lambda i: (0, 0)),   # W1 (VMEM resident)
            pl.BlockSpec((mh, mp), lambda i: (0, 0)),      # W2 block-diag
            pl.BlockSpec((1, mp), lambda i: (0, 0)),       # b2
        ],
        out_specs=pl.BlockSpec((tb, mp), lambda i: (i, 0)),
        compiler_params=pltpu.CompilerParams(
            dimension_semantics=("parallel",)),
    )(fa, kp["w1"], kp["w2b"], kp["b2"])

    return out[:B, :kp["n_out"]]


def make_raw_params(key, n_features, n_actions, n_additional, hidden):
    """Torch-like raw parameters of the module (f32)."""
    n_total = n_features + n_additional
    in_dim = n_features + n_actions
    k = jax.random.split(key, 5)
    # fc_pre: small init + identity, zero bias (as in the module __init__)
    wpre = 0.01 * jax.random.normal(k[0], (n_features, n_features),
                                    jnp.float32) + jnp.eye(n_features,
                                                           dtype=jnp.float32)
    bpre = jnp.zeros((1, n_features), jnp.float32)
    # synthetic per-model MLP ensemble (model_cls)
    w1 = 0.1 * jax.random.normal(k[1], (n_total, in_dim, hidden), jnp.float32)
    b1 = 0.1 * jax.random.normal(k[2], (n_total, hidden), jnp.float32)
    w2 = 0.1 * jax.random.normal(k[3], (n_total, hidden), jnp.float32)
    b2 = 0.1 * jax.random.normal(k[4], (n_total,), jnp.float32)
    return dict(wpre=wpre, bpre=bpre, w1=w1, b1=b1, w2=w2, b2=b2,
                n_features=n_features, n_actions=n_actions,
                n_total=n_total, hidden=hidden)


def prepare_kernel_params(raw, matmul_dtype=jnp.bfloat16):
    """Fold fc_pre + b1 into W1, flatten the ensemble, lane-pad everything."""
    nf, na = raw["n_features"], raw["n_actions"]
    m, hdim = raw["n_total"], raw["hidden"]
    mh = m * hdim
    mh_pad = _round_up(mh, LANE)
    m_pad = _round_up(m, LANE)

    # flatten per-model first layer to (in_dim, M*H), model-major columns
    w1_flat = jnp.transpose(raw["w1"], (1, 0, 2)).reshape(nf + na, mh)
    b1_flat = raw["b1"].reshape(1, mh)
    w1f, w1a = w1_flat[:nf], w1_flat[nf:]

    # fold the rotation  (f @ Wpre + bpre) @ W1f  ->  f @ (Wpre @ W1f) + bpre @ W1f
    w1f_fold = raw["wpre"] @ w1f
    b1_fold = b1_flat + raw["bpre"] @ w1f

    # stack [W1f'; W1a; b1'] so the kernel computes [f, a, 1] @ W1_aug
    w1_aug = jnp.concatenate([w1f_fold, w1a, b1_fold], axis=0)  # (nf+na+1, MH)
    w1_aug = jnp.pad(w1_aug, ((0, 0), (0, mh_pad - mh)))        # lane-pad MH

    # block-diagonal readout, zero-padded to a lane-dense (MH_pad, 128k) matrix
    w2b = jnp.zeros((mh_pad, m_pad), jnp.float32)
    for mi in range(m):
        w2b = w2b.at[mi * hdim:(mi + 1) * hdim, mi].set(raw["w2"][mi])
    b2 = jnp.zeros((1, m_pad), jnp.float32).at[0, :m].set(raw["b2"])

    return dict(w1=w1_aug.astype(matmul_dtype),
                w2b=w2b.astype(matmul_dtype),
                b2=b2,                 # f32: added after the f32 accumulate
                n_out=m)


def reference_forward(f_t, a_t, raw):
    """Pure-JAX f32 reference mirroring the PyTorch forward semantics."""
    f_rot = f_t @ raw["wpre"] + raw["bpre"]           # features_rotate (f @ W + b)
    fa = jnp.concatenate([f_rot, a_t], axis=1)        # cat([f_rot, a], dim=1)
    h = jnp.maximum(jnp.einsum("bi,mih->bmh", fa, raw["w1"]) + raw["b1"], 0.0)
    out = jnp.einsum("bmh,mh->bm", h, raw["w2"]) + raw["b2"]
    return out
    # TODO(synk): input_batchnorm=True (BatchNorm1d running stats) and
    # predict_change=True paths are not exercised in this default config.


if __name__ == "__main__":
    n_features, n_actions, n_additional, hidden, batch = 8, 4, 2, 32, 16

    key = jax.random.PRNGKey(0)
    kf, ka, kp = jax.random.split(key, 3)
    f_t = jax.random.normal(kf, (batch, n_features), jnp.float32)
    a_t = jax.random.normal(ka, (batch, n_actions), jnp.float32)
    raw = make_raw_params(kp, n_features, n_actions, n_additional, hidden)
    ref = reference_forward(f_t, a_t, raw)

    # f32 MXU path: must match the f32 reference tightly (weight-fold only
    # changes rounding order slightly).
    kp32 = prepare_kernel_params(raw, matmul_dtype=jnp.float32)
    out32 = jax.block_until_ready(many_network_combined_forward(f_t, a_t, kp32))
    assert out32.shape == (batch, raw["n_total"]), out32.shape
    assert jnp.allclose(out32, ref, atol=1e-5, rtol=1e-5), (
        float(jnp.max(jnp.abs(out32 - ref))))

    # bf16-at-the-MXU-boundary path (v6e/v7x recommendation), f32 accumulate.
    kpbf = prepare_kernel_params(raw, matmul_dtype=jnp.bfloat16)
    outbf = jax.block_until_ready(many_network_combined_forward(f_t, a_t, kpbf))
    assert outbf.shape == (batch, raw["n_total"]), outbf.shape
    assert jnp.allclose(outbf, ref, atol=1e-1, rtol=1e-1), (
        float(jnp.max(jnp.abs(outbf - ref))))

    print("KERNEL_OK")
</pallas_src>

<mosaic_0001>
module attributes {stable_mosaic.version = 11 : i64} {
  func.func @mncm_kernel(%arg0: i32, %arg1: memref<16x13xf32, #tpu.memory_space<vmem>>, %arg2: memref<13x384xf32, #tpu.memory_space<vmem>>, %arg3: memref<384x128xf32, #tpu.memory_space<vmem>>, %arg4: memref<1x128xf32, #tpu.memory_space<vmem>>, %arg5: memref<16x128xf32, #tpu.memory_space<vmem>>) attributes {dimension_semantics = [#tpu.dimension_semantics<parallel>], iteration_bounds = array<i64: 1>, scalar_prefetch = 0 : i64, scratch_operands = 0 : i64, tpu.core_type = #tpu.core_type<tc>, window_params = [{transform_indices = @transform_0, window_bounds = array<i64: 16, 13>}, {pipeline_mode = #tpu.pipeline_mode<synchronous>, transform_indices = @transform_1, window_bounds = array<i64: 13, 384>}, {pipeline_mode = #tpu.pipeline_mode<synchronous>, transform_indices = @transform_2, window_bounds = array<i64: 384, 128>}, {pipeline_mode = #tpu.pipeline_mode<synchronous>, transform_indices = @transform_3, window_bounds = array<i64: 1, 128>}, {transform_indices = @transform_4, window_bounds = array<i64: 16, 128>}]} {
    %c0 = arith.constant 0 : index
    %c0_0 = arith.constant 0 : index
    %0 = vector.load %arg1[%c0, %c0_0] : memref<16x13xf32, #tpu.memory_space<vmem>>, vector<16x13xf32>
    %c0_1 = arith.constant 0 : index
    %c0_2 = arith.constant 0 : index
    %1 = vector.load %arg2[%c0_1, %c0_2] : memref<13x384xf32, #tpu.memory_space<vmem>>, vector<13x384xf32>
    %cst = arith.constant dense<0.000000e+00> : vector<16x384xf32>
    %2 = tpu.matmul %0, %1, %cst {dimension_numbers = #tpu.dot_dimension_numbers<[1], [0], [0], [1], [0, 0, 1, 1], [], []>} : vector<16x13xf32>, vector<13x384xf32>, vector<16x384xf32> -> vector<16x384xf32>
    %cst_3 = arith.constant 0.000000e+00 : f32
    %3 = vector.broadcast %cst_3 : f32 to vector<16x384xf32>
    %4 = arith.maximumf %2, %3 : vector<16x384xf32>
    %c0_4 = arith.constant 0 : index
    %c0_5 = arith.constant 0 : index
    %5 = vector.load %arg3[%c0_4, %c0_5] : memref<384x128xf32, #tpu.memory_space<vmem>>, vector<384x128xf32>
    %cst_6 = arith.constant dense<0.000000e+00> : vector<16x128xf32>
    %6 = tpu.matmul %4, %5, %cst_6 {dimension_numbers = #tpu.dot_dimension_numbers<[1], [0], [0], [1], [0, 0, 1, 1], [], []>} : vector<16x384xf32>, vector<384x128xf32>, vector<16x128xf32> -> vector<16x128xf32>
    %c0_7 = arith.constant 0 : index
    %c0_8 = arith.constant 0 : index
    %7 = vector.load %arg4[%c0_7, %c0_8] : memref<1x128xf32, #tpu.memory_space<vmem>>, vector<1x128xf32>
    %8 = vector.broadcast %7 : vector<1x128xf32> to vector<16x128xf32>
    %9 = arith.addf %6, %8 : vector<16x128xf32>
    %c0_9 = arith.constant 0 : index
    %c0_10 = arith.constant 0 : index
    %10 = vector.load %arg5[%c0_9, %c0_10] : memref<16x128xf32, #tpu.memory_space<vmem>>, vector<16x128xf32>
    tpu.vector_store %arg5[%c0_9, %c0_10], %9 {strides = array<i32>} : memref<16x128xf32, #tpu.memory_space<vmem>>, vector<16x128xf32>,
    return
  }
  func.func @transform_0(%arg0: i32) -> (i32, i32) {
    %c0_i32 = arith.constant 0 : i32
    %c0_i32_0 = arith.constant 0 : i32
    return %arg0, %c0_i32 : i32, i32
  }
  func.func @transform_1(%arg0: i32) -> (i32, i32) {
    %c0_i32 = arith.constant 0 : i32
    %c0_i32_0 = arith.constant 0 : i32
    %c0_i32_1 = arith.constant 0 : i32
    return %c0_i32, %c0_i32_0 : i32, i32
  }
  func.func @transform_2(%arg0: i32) -> (i32, i32) {
    %c0_i32 = arith.constant 0 : i32
    %c0_i32_0 = arith.constant 0 : i32
    %c0_i32_1 = arith.constant 0 : i32
    return %c0_i32, %c0_i32_0 : i32, i32
  }
  func.func @transform_3(%arg0: i32) -> (i32, i32) {
    %c0_i32 = arith.constant 0 : i32
    %c0_i32_0 = arith.constant 0 : i32
    %c0_i32_1 = arith.constant 0 : i32
    return %c0_i32, %c0_i32_0 : i32, i32
  }
  func.func @transform_4(%arg0: i32) -> (i32, i32) {
    %c0_i32 = arith.constant 0 : i32
    %c0_i32_0 = arith.constant 0 : i32
    return %arg0, %c0_i32 : i32, i32
  }
}

</mosaic_0001>

<llo_original>
// kernel: tpu_custom_call.1
$region0: #{tpu_custom_call.1}
  #allocation0 [shape = 'u32[]', space=smem, size = 0x4, offset = 0x4, fixed_abs, tag = 'smem constant byte address 0x4 - core index']
  #allocation1 [shape = 'u32[72,128]{1,0:T(1,128)}', space=vmem, size = 0x9000, scoped, tag = 'internal scratch']
  %s0 = inlined_call_operand.hbm [shape: f32[16,13], index: 0, kind: input, shape index: {}]
  %s1 = inlined_call_operand.hbm [shape: f32[13,384], index: 1, kind: input, shape index: {}]
  %s2 = inlined_call_operand.hbm [shape: f32[384,128], index: 2, kind: input, shape index: {}]
  %s3 = inlined_call_operand.vmem [shape: f32[1,128], index: 3, kind: input, shape index: {}]
  %s4 = inlined_call_operand.hbm [shape: f32[16,128], index: 4, kind: output, shape index: {}]
  %s5 = sld [smem:[#allocation0]]
  $region38: #{tpu_custom_call.1} parent=0
    _
  %s7 = ssub.s32 1, %s5
  %s8 = scalar_select 0, %s7, %s5
  $region1: #{tpu_custom_call.1} parent=0
    #allocation2 [shape = 'u8[8192]{0}', space=vmem, size = 0x2000, scoped, tag = 'input window, operand 0, single buffered']
    #allocation3 [shape = 's32[1]{0}', space=sflag, size = 0x4, scoped, tag = 'scoped memory for tpu_custom_call.1']
    #allocation4 [shape = 's32[1]{0}', space=sflag, size = 0x4, scoped, tag = 'scoped memory for tpu_custom_call.1']
    #allocation5 [shape = 'u8[24576]{0}', space=vmem, size = 0x6000, scoped, tag = 'input window, operand 1, single buffered']
    #allocation6 [shape = 's32[1]{0}', space=sflag, size = 0x4, scoped, tag = 'scoped memory for tpu_custom_call.1']
    #allocation7 [shape = 'u8[196608]{0}', space=vmem, size = 0x30000, scoped, tag = 'input window, operand 2, single buffered']
    #allocation8 [shape = 'u8[8192]{0}', space=vmem, size = 0x2000, scoped, tag = 'output window, operand 0, single buffered']
    %9 = vsyncpa [#allocation3], 0
    %10 = vsyncpa [#allocation6], 0
    %11 = vsyncpa [#allocation4], 0
    // Predicated region
    $region2: #{tpu_custom_call.1} parent=1 // pred_check
      _
    $region3: #{tpu_custom_call.1} parent=1 // pred_check_branch
      %13 = sbr.rel (0) target = $region5
    $region4: #{tpu_custom_call.1} parent=1 // pred_region
      %15 = vsyncadd [#allocation3], 0
      %s16 = sshll.u32 %s0, 4
      %s17 = int_to_ptr.hbm [resolvable:$true] %s16
      %s18 = sshll.u32 [#allocation2], 4
      %s19 = int_to_ptr.vmem [resolvable:$true] %s18
      %24 = dma.hbm_to_vmem [thread:$0]  %s17, 256, %s19, [#allocation3], 128, 128, 8
    $region5: #{tpu_custom_call.1} parent=1 // pred_fallthru
      _
    // Predicated region
    $region6: #{tpu_custom_call.1} parent=1 // pred_check
      _
    $region7: #{tpu_custom_call.1} parent=1 // pred_check_branch
      %26 = sbr.rel (0) target = $region9
    $region8: #{tpu_custom_call.1} parent=1 // pred_region
      %28 = vsyncadd [#allocation6], 0
      %s29 = sshll.u32 %s1, 4
      %s30 = int_to_ptr.hbm [resolvable:$true] %s29
      %s31 = sshll.u32 [#allocation5], 4
      %s32 = int_to_ptr.vmem [resolvable:$true] %s31
      %37 = dma.hbm_to_vmem [thread:$0]  %s30, 768, %s32, [#allocation6], 384, 384, 24
    $region9: #{tpu_custom_call.1} parent=1 // pred_fallthru
      _
    // Predicated region
    $region10: #{tpu_custom_call.1} parent=1 // pred_check
      _
    $region11: #{tpu_custom_call.1} parent=1 // pred_check_branch
      %39 = sbr.rel (0) target = $region13
    $region12: #{tpu_custom_call.1} parent=1 // pred_region
      %41 = vsyncadd [#allocation6], 0
      %s42 = sshll.u32 %s2, 4
      %s43 = int_to_ptr.hbm [resolvable:$true] %s42
      %s44 = sshll.u32 [#allocation7], 4
      %s45 = int_to_ptr.vmem [resolvable:$true] %s44
      %50 = dma.hbm_to_vmem [thread:$0]  %s43, 6144, %s45, [#allocation6], 128, 128, 8
    $region13: #{tpu_custom_call.1} parent=1 // pred_fallthru
      _
    // Predicated region
    $region14: #{tpu_custom_call.1} parent=1 // pred_check
      _
    $region15: #{tpu_custom_call.1} parent=1 // pred_check_branch
      %52 = sbr.rel (0) target = $region17
    $region16: #{tpu_custom_call.1} parent=1 // pred_region
      _
    $region17: #{tpu_custom_call.1} parent=1 // pred_fallthru
      _
    // Predicated region
    $region18: #{tpu_custom_call.1} parent=1 // pred_check
      _
    $region19: #{tpu_custom_call.1} parent=1 // pred_check_branch
      %54 = sbr.rel (0) target = $region21
    $region20: #{tpu_custom_call.1} parent=1 // pred_region
      %56 = dma.done [#allocation3], 256
    $region21: #{tpu_custom_call.1} parent=1 // pred_fallthru
      _
    // Predicated region
    $region22: #{tpu_custom_call.1} parent=1 // pred_check
      _
    $region23: #{tpu_custom_call.1} parent=1 // pred_check_branch
      %58 = sbr.rel (0) target = $region25
    $region24: #{tpu_custom_call.1} parent=1 // pred_region
      %60 = dma.done [#allocation6], 768
    $region25: #{tpu_custom_call.1} parent=1 // pred_fallthru
      _
    // Predicated region
    $region26: #{tpu_custom_call.1} parent=1 // pred_check
      _
    $region27: #{tpu_custom_call.1} parent=1 // pred_check_branch
      %62 = sbr.rel (0) target = $region29
    $region28: #{tpu_custom_call.1} parent=1 // pred_region
      %64 = dma.done [#allocation6], 6144
    $region29: #{tpu_custom_call.1} parent=1 // pred_fallthru
      _
    %v65 = vld [vmem:[#allocation2] sm:$0xff]
    %v66 = vld [vmem:[#allocation2 + $0x8] sm:$0xff]
    %v67 = vld [vmem:[#allocation5] sm:$0xff]
    %v68 = vld [vmem:[#allocation5 + $0x8] sm:$0xff]
    %v69 = vld [vmem:[#allocation5 + $0x10] sm:$0xff]
    %v70 = vld [vmem:[#allocation5 + $0x18] sm:$0x1f]
    %v71 = vld [vmem:[#allocation5 + $0x20] sm:$0x1f]
    %v72 = vld [vmem:[#allocation5 + $0x28] sm:$0x1f]
    %vm73 = vcmask 105472
    %v75 = vsel %vm73, %v65, 0
    %v78 = vsel %vm73, %v66, 0
    %vm80 = vcmask 1044480
    %v82 = vsel %vm80, %v70, 0
    %v85 = vsel %vm80, %v71, 0
    %v88 = vsel %vm80, %v72, 0
    %90 = vmatpush.msra.mxu0 0.0
    %91 = vmatpush.msra.mxu0 0.0
    %92 = vmatpush.msra.mxu0 0.0
    %93 = vmatpush.msra.mxu0 0.0
    %94 = vmatpush.msra.mxu0 0.0
    %95 = vmatpush.msra.mxu0 0.0
    %96 = vmatpush.msra.mxu0 0.0
    %97 = vmatpush.msra.mxu0 0.0
    %98 = vmatpush.msra.mxu0 0.0
    %99 = vmatpush.msra.mxu0 0.0
    %100 = vmatpush.msra.mxu0 0.0
    %101 = vmatpush.msra.mxu0 0.0
    %102 = vmatpush.msra.mxu0 0.0
    %103 = vmatpush.msra.mxu0 0.0
    %104 = vmatpush.msra.mxu0 %v82
    %105 = vmatpush.msra.mxu0 %v67
    %106 = vmatmul.f32.gmra.mxu0 %v75
    %v107 = vpop.f32.mrf.mxu0
    %v108 = vadd.f32 0.0, %v107
    %109 = vmatmul.f32.gmra.mxu0 %v78
    %v110 = vpop.f32.mrf.mxu0
    %v111 = vadd.f32 0.0, %v110
    %112 = vdwg.mxu0
    %113 = vmatpush.msra.mxu0 0.0
    %114 = vmatpush.msra.mxu0 0.0
    %115 = vmatpush.msra.mxu0 0.0
    %116 = vmatpush.msra.mxu0 0.0
    %117 = vmatpush.msra.mxu0 0.0
    %118 = vmatpush.msra.mxu0 0.0
    %119 = vmatpush.msra.mxu0 0.0
    %120 = vmatpush.msra.mxu0 0.0
    %121 = vmatpush.msra.mxu0 0.0
    %122 = vmatpush.msra.mxu0 0.0
    %123 = vmatpush.msra.mxu0 0.0
    %124 = vmatpush.msra.mxu0 0.0
    %125 = vmatpush.msra.mxu0 0.0
    %126 = vmatpush.msra.mxu0 0.0
    %127 = vmatpush.msra.mxu0 %v85
    %128 = vmatpush.msra.mxu0 %v68
    %129 = vmatmul.f32.gmra.mxu0 %v75
    %v130 = vpop.f32.mrf.mxu0
    %v131 = vadd.f32 0.0, %v130
    %132 = vmatmul.f32.gmra.mxu0 %v78
    %v133 = vpop.f32.mrf.mxu0
    %v134 = vadd.f32 0.0, %v133
    %135 = vdwg.mxu0
    %136 = vmatpush.msra.mxu0 0.0
    %137 = vmatpush.msra.mxu0 0.0
    %138 = vmatpush.msra.mxu0 0.0
    %139 = vmatpush.msra.mxu0 0.0
    %140 = vmatpush.msra.mxu0 0.0
    %141 = vmatpush.msra.mxu0 0.0
    %142 = vmatpush.msra.mxu0 0.0
    %143 = vmatpush.msra.mxu0 0.0
    %144 = vmatpush.msra.mxu0 0.0
    %145 = vmatpush.msra.mxu0 0.0
    %146 = vmatpush.msra.mxu0 0.0
    %147 = vmatpush.msra.mxu0 0.0
    %148 = vmatpush.msra.mxu0 0.0
    %149 = vmatpush.msra.mxu0 0.0
    %150 = vmatpush.msra.mxu0 %v88
    %151 = vmatpush.msra.mxu0 %v69
    %152 = vmatmul.f32.gmra.mxu0 %v75
    %v153 = vpop.f32.mrf.mxu0
    %v154 = vadd.f32 0.0, %v153
    %155 = vmatmul.f32.gmra.mxu0 %v78
    %v156 = vpop.f32.mrf.mxu0
    %v157 = vadd.f32 0.0, %v156
    %158 = vdwg.mxu0
    %v159 = vmax.f32 %v108, 0.0
    %v160 = vmax.f32 %v131, 0.0
    %v161 = vmax.f32 %v154, 0.0
    %v162 = vmax.f32 %v111, 0.0
    %v163 = vmax.f32 %v134, 0.0
    %v164 = vmax.f32 %v157, 0.0
    %v165 = vld [vmem:[#allocation7] sm:$0xff]
    %v166 = vld [vmem:[#allocation7 + $0x8] sm:$0xff]
    %v167 = vld [vmem:[#allocation7 + $0x10] sm:$0xff]
    %v168 = vld [vmem:[#allocation7 + $0x18] sm:$0xff]
    %v169 = vld [vmem:[#allocation7 + $0x20] sm:$0xff]
    %v170 = vld [vmem:[#allocation7 + $0x28] sm:$0xff]
    %v171 = vld [vmem:[#allocation7 + $0x30] sm:$0xff]
    %v172 = vld [vmem:[#allocation7 + $0x38] sm:$0xff]
    %v173 = vld [vmem:[#allocation7 + $0x40] sm:$0xff]
    %v174 = vld [vmem:[#allocation7 + $0x48] sm:$0xff]
    %v175 = vld [vmem:[#allocation7 + $0x50] sm:$0xff]
    %v176 = vld [vmem:[#allocation7 + $0x58] sm:$0xff]
    %v177 = vld [vmem:[#allocation7 + $0x60] sm:$0xff]
    %v178 = vld [vmem:[#allocation7 + $0x68] sm:$0xff]
    %v179 = vld [vmem:[#allocation7 + $0x70] sm:$0xff]
    %v180 = vld [vmem:[#allocation7 + $0x78] sm:$0xff]
    %v181 = vld [vmem:[#allocation7 + $0x80] sm:$0xff]
    %v182 = vld [vmem:[#allocation7 + $0x88] sm:$0xff]
    %v183 = vld [vmem:[#allocation7 + $0x90] sm:$0xff]
    %v184 = vld [vmem:[#allocation7 + $0x98] sm:$0xff]
    %v185 = vld [vmem:[#allocation7 + $0xa0] sm:$0xff]
    %v186 = vld [vmem:[#allocation7 + $0xa8] sm:$0xff]
    %v187 = vld [vmem:[#allocation7 + $0xb0] sm:$0xff]
    %v188 = vld [vmem:[#allocation7 + $0xb8] sm:$0xff]
    %v189 = vld [vmem:[#allocation7 + $0xc0] sm:$0xff]
    %v190 = vld [vmem:[#allocation7 + $0xc8] sm:$0xff]
    %v191 = vld [vmem:[#allocation7 + $0xd0] sm:$0xff]
    %v192 = vld [vmem:[#allocation7 + $0xd8] sm:$0xff]
    %v193 = vld [vmem:[#allocation7 + $0xe0] sm:$0xff]
    %v194 = vld [vmem:[#allocation7 + $0xe8] sm:$0xff]
    %v195 = vld [vmem:[#allocation7 + $0xf0] sm:$0xff]
    %v196 = vld [vmem:[#allocation7 + $0xf8] sm:$0xff]
    %v197 = vld [vmem:[#allocation7 + $0x100] sm:$0xff]
    %v198 = vld [vmem:[#allocation7 + $0x108] sm:$0xff]
    %v199 = vld [vmem:[#allocation7 + $0x110] sm:$0xff]
    %v200 = vld [vmem:[#allocation7 + $0x118] sm:$0xff]
    %v201 = vld [vmem:[#allocation7 + $0x120] sm:$0xff]
    %v202 = vld [vmem:[#allocation7 + $0x128] sm:$0xff]
    %v203 = vld [vmem:[#allocation7 + $0x130] sm:$0xff]
    %v204 = vld [vmem:[#allocation7 + $0x138] sm:$0xff]
    %v205 = vld [vmem:[#allocation7 + $0x140] sm:$0xff]
    %v206 = vld [vmem:[#allocation7 + $0x148] sm:$0xff]
    %v207 = vld [vmem:[#allocation7 + $0x150] sm:$0xff]
    %v208 = vld [vmem:[#allocation7 + $0x158] sm:$0xff]
    %v209 = vld [vmem:[#allocation7 + $0x160] sm:$0xff]
    %v210 = vld [vmem:[#allocation7 + $0x168] sm:$0xff]
    %v211 = vld [vmem:[#allocation7 + $0x170] sm:$0xff]
    %v212 = vld [vmem:[#allocation7 + $0x178] sm:$0xff]
    %v213 = vld [vmem:[%s3] sm:$0x1]
    %v215 = vperm.slane %v213, 0
    %217 = vmatpush.msra.mxu0 %v180
    %218 = vmatpush.msra.mxu0 %v179
    %219 = vmatpush.msra.mxu0 %v178
    %220 = vmatpush.msra.mxu0 %v177
    %221 = vmatpush.msra.mxu0 %v176
    %222 = vmatpush.msra.mxu0 %v175
    %223 = vmatpush.msra.mxu0 %v174
    %224 = vmatpush.msra.mxu0 %v173
    %225 = vmatpush.msra.mxu0 %v172
    %226 = vmatpush.msra.mxu0 %v171
    %227 = vmatpush.msra.mxu0 %v170
    %228 = vmatpush.msra.mxu0 %v169
    %229 = vmatpush.msra.mxu0 %v168
    %230 = vmatpush.msra.mxu0 %v167
    %231 = vmatpush.msra.mxu0 %v166
    %232 = vmatpush.msra.mxu0 %v165
    %233 = vmatmul.f32.gmra.mxu0 %v159
    %v234 = vpop.f32.mrf.mxu0
    %v235 = vadd.f32 %v215, %v234
    %236 = vmatmul.f32.gmra.mxu0 %v162
    %v237 = vpop.f32.mrf.mxu0
    %v238 = vadd.f32 %v215, %v237
    %239 = vdwg.mxu0
    %240 = vmatpush.msra.mxu0 %v196
    %241 = vmatpush.msra.mxu0 %v195
    %242 = vmatpush.msra.mxu0 %v194
    %243 = vmatpush.msra.mxu0 %v193
    %244 = vmatpush.msra.mxu0 %v192
    %245 = vmatpush.msra.mxu0 %v191
    %246 = vmatpush.msra.mxu0 %v190
    %247 = vmatpush.msra.mxu0 %v189
    %248 = vmatpush.msra.mxu0 %v188
    %249 = vmatpush.msra.mxu0 %v187
    %250 = vmatpush.msra.mxu0 %v186
    %251 = vmatpush.msra.mxu0 %v185
    %252 = vmatpush.msra.mxu0 %v184
    %253 = vmatpush.msra.mxu0 %v183
    %254 = vmatpush.msra.mxu0 %v182
    %255 = vmatpush.msra.mxu0 %v181
    %256 = vmatmul.f32.gmra.mxu0 %v160
    %v257 = vpop.f32.mrf.mxu0
    %v258 = vadd.f32 %v235, %v257
    %259 = vmatmul.f32.gmra.mxu0 %v163
    %v260 = vpop.f32.mrf.mxu0
    %v261 = vadd.f32 %v238, %v260
    %262 = vdwg.mxu0
    %263 = vmatpush.msra.mxu0 %v212
    %264 = vmatpush.msra.mxu0 %v211
    %265 = vmatpush.msra.mxu0 %v210
    %266 = vmatpush.msra.mxu0 %v209
    %267 = vmatpush.msra.mxu0 %v208
    %268 = vmatpush.msra.mxu0 %v207
    %269 = vmatpush.msra.mxu0 %v206
    %270 = vmatpush.msra.mxu0 %v205
    %271 = vmatpush.msra.mxu0 %v204
    %272 = vmatpush.msra.mxu0 %v203
    %273 = vmatpush.msra.mxu0 %v202
    %274 = vmatpush.msra.mxu0 %v201
    %275 = vmatpush.msra.mxu0 %v200
    %276 = vmatpush.msra.mxu0 %v199
    %277 = vmatpush.msra.mxu0 %v198
    %278 = vmatpush.msra.mxu0 %v197
    %279 = vmatmul.f32.gmra.mxu0 %v161
    %v280 = vpop.f32.mrf.mxu0
    %v281 = vadd.f32 %v258, %v280
    %282 = vmatmul.f32.gmra.mxu0 %v164
    %v283 = vpop.f32.mrf.mxu0
    %v284 = vadd.f32 %v261, %v283
    %285 = vdwg.mxu0
    %286 = vst [vmem:[#allocation8] sm:$0xff] %v281
    %287 = vst [vmem:[#allocation8 + $0x8] sm:$0xff] %v284
    // Predicated region
    $region30: #{tpu_custom_call.1} parent=1 // pred_check
      _
    $region31: #{tpu_custom_call.1} parent=1 // pred_check_branch
      %289 = sbr.rel (0) target = $region33
    $region32: #{tpu_custom_call.1} parent=1 // pred_region
      %291 = vsyncadd [#allocation4], 0
      %s292 = sshll.u32 [#allocation8], 4
      %s293 = int_to_ptr.vmem [resolvable:$true] %s292
      %s294 = sshll.u32 %s4, 4
      %s295 = int_to_ptr.hbm [resolvable:$true] %s294
      %300 = dma.vmem_to_hbm [thread:$0]  %s293, 256, %s295, [#allocation4], 128, 128, 8
    $region33: #{tpu_custom_call.1} parent=1 // pred_fallthru
      _
    // Predicated region
    $region34: #{tpu_custom_call.1} parent=1 // pred_check
      _
    $region35: #{tpu_custom_call.1} parent=1 // pred_check_branch
      %302 = sbr.rel (0) target = $region37
    $region36: #{tpu_custom_call.1} parent=1 // pred_region
      %304 = dma.done [#allocation4], 256
    $region37: #{tpu_custom_call.1} parent=1 // pred_fallthru
      _
    %305 = vsyncpa [#allocation3], 1
    %306 = vsyncpa [#allocation6], 1
    %307 = vsyncpa [#allocation4], 1

</llo_original>
